<compile_context>
chip_gen: v7x
topology: tpu7x:2x2x1
jax: 0.10.0
libtpu: 0.0.40
codegen_flags: <defaults>
</compile_context>

<pallas_src>
import functools

import jax
import jax.numpy as jnp
from jax.experimental import pallas as pl
from jax.experimental.pallas import tpu as pltpu


def _round_up(x: int, m: int) -> int:
    return (x + m - 1) // m * m


def linear_kernel(x_ref, w_ref, b_ref, o_ref):
    # x_ref: (TB, d_in) bf16, w_ref: (d_in, d_out_p) bf16,
    # b_ref: (1, d_out_p) f32,  o_ref: (TB, d_out_p) f32
    acc = jnp.dot(x_ref[...], w_ref[...], preferred_element_type=jnp.float32)
    o_ref[...] = acc + b_ref[...]


def prepare_params(weight, bias):
    """One-time preprocessing of nn.Linear params (keep cached; NOT per step).

    weight: (d_out, d_in) f32 -> (d_in, d_out_p) bf16, pre-transposed + lane-padded
    bias:   (d_out,)      f32 -> (1, d_out_p) f32, lane-padded
    """
    d_out, d_in = weight.shape
    d_out_p = _round_up(d_out, 128)  # lane-dense output tile / MXU N dimension
    w_t = jnp.zeros((d_in, d_out_p), dtype=jnp.bfloat16)
    w_t = w_t.at[:, :d_out].set(weight.T.astype(jnp.bfloat16))
    b_p = jnp.zeros((1, d_out_p), dtype=jnp.float32)
    b_p = b_p.at[:, :d_out].set(bias.astype(jnp.float32))
    return w_t, b_p


@functools.partial(jax.jit, static_argnames=("d_out",))
def dqn_agent_forward(x, w_prepared, b_prepared, *, d_out):
    """Forward of DQNAgent: fc1(x) == x @ weight.T + bias (padded params)."""
    B, d_in = x.shape
    d_out_p = w_prepared.shape[1]

    # bf16 activations for the MXU; accumulation stays f32 inside the kernel.
    x_bf16 = x.astype(jnp.bfloat16)

    # Batch tiling: TB rows per grid step (multiple of 8 sublanes, <= 512 so a
    # tile [2x x-tile + 2x out-tile + resident W/b] stays far under v7x's
    # 32 MiB scoped VMEM default even for much larger d_in / d_out).
    TB = min(512, _round_up(B, 8))
    B_pad = _round_up(B, TB)
    if B_pad != B:
        x_bf16 = jnp.pad(x_bf16, ((0, B_pad - B), (0, 0)))

    out = pl.pallas_call(
        linear_kernel,
        out_shape=jax.ShapeDtypeStruct((B_pad, d_out_p), jnp.float32),
        grid_spec=pl.GridSpec(
            grid=(B_pad // TB,),
            in_specs=[
                pl.BlockSpec((TB, d_in), lambda i: (i, 0)),        # stream x tiles
                pl.BlockSpec((d_in, d_out_p), lambda i: (0, 0)),   # resident weight
                pl.BlockSpec((1, d_out_p), lambda i: (0, 0)),      # resident bias
            ],
            out_specs=pl.BlockSpec((TB, d_out_p), lambda i: (i, 0)),
        ),
        compiler_params=pltpu.CompilerParams(
            # Independent batch tiles -> shard across v7x's 2 TCs; neutral on v5e/v6e.
            dimension_semantics=("parallel",),
        ),
    )(x_bf16, w_prepared, b_prepared)

    # Slice away lane padding (and any batch padding) before returning.
    return out[:B, :d_out]


if __name__ == "__main__":
    # Small shapes implied by the module: a flat feature vector in, Q-values out.
    batch = 8
    input_dim = 32
    output_dim = 16

    key = jax.random.PRNGKey(0)
    kx, kw, kb = jax.random.split(key, 3)

    x = jax.random.normal(kx, (batch, input_dim), dtype=jnp.float32)
    # Deterministic synthetic parameters (shapes from nn.Linear(input_dim, output_dim)).
    weight = jax.random.normal(kw, (output_dim, input_dim), dtype=jnp.float32) * 0.1
    bias = jax.random.normal(kb, (output_dim,), dtype=jnp.float32) * 0.1

    # One-time param prep (off the hot path; cache these alongside the params).
    w_prep, b_prep = prepare_params(weight, bias)

    out = dqn_agent_forward(x, w_prep, b_prep, d_out=output_dim)
    out = jax.block_until_ready(out)

    # Pure-JAX f32 reference check (tolerance loosened for bf16 matmul inputs).
    ref = x @ weight.T + bias
    assert out.shape == (batch, output_dim)
    assert jnp.allclose(out, ref, atol=2e-2, rtol=2e-2), float(
        jnp.max(jnp.abs(out - ref))
    )

    print("KERNEL_OK")
</pallas_src>

<mosaic_0001>
module attributes {stable_mosaic.version = 11 : i64} {
  func.func @linear_kernel(%arg0: i32, %arg1: memref<8x32xbf16, #tpu.memory_space<vmem>>, %arg2: memref<32x128xbf16, #tpu.memory_space<vmem>>, %arg3: memref<1x128xf32, #tpu.memory_space<vmem>>, %arg4: memref<8x128xf32, #tpu.memory_space<vmem>>) attributes {dimension_semantics = [#tpu.dimension_semantics<parallel>], iteration_bounds = array<i64: 1>, scalar_prefetch = 0 : i64, scratch_operands = 0 : i64, tpu.core_type = #tpu.core_type<tc>, window_params = [{transform_indices = @transform_0, window_bounds = array<i64: 8, 32>}, {pipeline_mode = #tpu.pipeline_mode<synchronous>, transform_indices = @transform_1, window_bounds = array<i64: 32, 128>}, {pipeline_mode = #tpu.pipeline_mode<synchronous>, transform_indices = @transform_2, window_bounds = array<i64: 1, 128>}, {transform_indices = @transform_3, window_bounds = array<i64: 8, 128>}]} {
    %c0 = arith.constant 0 : index
    %c0_0 = arith.constant 0 : index
    %0 = vector.load %arg1[%c0, %c0_0] : memref<8x32xbf16, #tpu.memory_space<vmem>>, vector<8x32xbf16>
    %c0_1 = arith.constant 0 : index
    %c0_2 = arith.constant 0 : index
    %1 = vector.load %arg2[%c0_1, %c0_2] : memref<32x128xbf16, #tpu.memory_space<vmem>>, vector<32x128xbf16>
    %cst = arith.constant dense<0.000000e+00> : vector<8x128xf32>
    %2 = tpu.matmul %0, %1, %cst {dimension_numbers = #tpu.dot_dimension_numbers<[1], [0], [0], [1], [0, 0, 1, 1], [], []>} : vector<8x32xbf16>, vector<32x128xbf16>, vector<8x128xf32> -> vector<8x128xf32>
    %c0_3 = arith.constant 0 : index
    %c0_4 = arith.constant 0 : index
    %3 = vector.load %arg3[%c0_3, %c0_4] : memref<1x128xf32, #tpu.memory_space<vmem>>, vector<1x128xf32>
    %4 = vector.broadcast %3 : vector<1x128xf32> to vector<8x128xf32>
    %5 = arith.addf %2, %4 : vector<8x128xf32>
    %c0_5 = arith.constant 0 : index
    %c0_6 = arith.constant 0 : index
    %6 = vector.load %arg4[%c0_5, %c0_6] : memref<8x128xf32, #tpu.memory_space<vmem>>, vector<8x128xf32>
    tpu.vector_store %arg4[%c0_5, %c0_6], %5 {strides = array<i32>} : memref<8x128xf32, #tpu.memory_space<vmem>>, vector<8x128xf32>,
    return
  }
  func.func @transform_0(%arg0: i32) -> (i32, i32) {
    %c0_i32 = arith.constant 0 : i32
    %c0_i32_0 = arith.constant 0 : i32
    return %arg0, %c0_i32 : i32, i32
  }
  func.func @transform_1(%arg0: i32) -> (i32, i32) {
    %c0_i32 = arith.constant 0 : i32
    %c0_i32_0 = arith.constant 0 : i32
    %c0_i32_1 = arith.constant 0 : i32
    return %c0_i32, %c0_i32_0 : i32, i32
  }
  func.func @transform_2(%arg0: i32) -> (i32, i32) {
    %c0_i32 = arith.constant 0 : i32
    %c0_i32_0 = arith.constant 0 : i32
    %c0_i32_1 = arith.constant 0 : i32
    return %c0_i32, %c0_i32_0 : i32, i32
  }
  func.func @transform_3(%arg0: i32) -> (i32, i32) {
    %c0_i32 = arith.constant 0 : i32
    %c0_i32_0 = arith.constant 0 : i32
    return %arg0, %c0_i32 : i32, i32
  }
}

</mosaic_0001>

<llo_original>
// kernel: dqn_agent_forward.1
$region0: #{dqn_agent_forward.1}
  #allocation0 [shape = 'u32[]', space=smem, size = 0x4, offset = 0x4, fixed_abs, tag = 'smem constant byte address 0x4 - core index']
  #allocation1 [shape = 'u32[144,128]{1,0:T(1,128)}', space=vmem, size = 0x12000, scoped, tag = 'internal scratch']
  %s0 = inlined_call_operand.vmem [shape: bf16[8,32], index: 0, kind: input, shape index: {}]
  %s1 = inlined_call_operand.hbm [shape: bf16[32,128], index: 1, kind: input, shape index: {}]
  %s2 = inlined_call_operand.vmem [shape: f32[1,128], index: 2, kind: input, shape index: {}]
  %s3 = inlined_call_operand.hbm [shape: f32[8,128], index: 3, kind: output, shape index: {}]
  %s4 = sld [smem:[#allocation0]]
  $region26: #{dqn_agent_forward.1} parent=0
    _
  %s6 = ssub.s32 1, %s4
  %s7 = scalar_select 0, %s6, %s4
  $region1: #{dqn_agent_forward.1} parent=0
    #allocation2 [shape = 'u8[8192]{0}', space=vmem, size = 0x2000, scoped, tag = 'input window, operand 1, single buffered']
    #allocation3 [shape = 's32[1]{0}', space=sflag, size = 0x4, scoped, tag = 'scoped memory for dqn_agent_forward.1']
    #allocation4 [shape = 's32[1]{0}', space=sflag, size = 0x4, scoped, tag = 'scoped memory for dqn_agent_forward.1']
    #allocation5 [shape = 'u8[4096]{0}', space=vmem, size = 0x1000, scoped, tag = 'output window, operand 0, single buffered']
    %8 = vsyncpa [#allocation3], 0
    %9 = vsyncpa [#allocation4], 0
    // Predicated region
    $region2: #{dqn_agent_forward.1} parent=1 // pred_check
      _
    $region3: #{dqn_agent_forward.1} parent=1 // pred_check_branch
      %11 = sbr.rel (0) target = $region5
    $region4: #{dqn_agent_forward.1} parent=1 // pred_region
      _
    $region5: #{dqn_agent_forward.1} parent=1 // pred_fallthru
      _
    // Predicated region
    $region6: #{dqn_agent_forward.1} parent=1 // pred_check
      _
    $region7: #{dqn_agent_forward.1} parent=1 // pred_check_branch
      %13 = sbr.rel (0) target = $region9
    $region8: #{dqn_agent_forward.1} parent=1 // pred_region
      %s15 = ssub.s32 256, 256
      %16 = vsyncadd [#allocation3], %s15
      %s17 = sshll.u32 [#allocation2], 4
      %s18 = int_to_ptr.vmem [resolvable:$true] %s17
      %23 = dma.hbm_to_vmem [thread:$0]  %s1, 256, %s18, [#allocation3], 64, 64, 4
    $region9: #{dqn_agent_forward.1} parent=1 // pred_fallthru
      _
    // Predicated region
    $region10: #{dqn_agent_forward.1} parent=1 // pred_check
      _
    $region11: #{dqn_agent_forward.1} parent=1 // pred_check_branch
      %25 = sbr.rel (0) target = $region13
    $region12: #{dqn_agent_forward.1} parent=1 // pred_region
      _
    $region13: #{dqn_agent_forward.1} parent=1 // pred_fallthru
      _
    // Predicated region
    $region14: #{dqn_agent_forward.1} parent=1 // pred_check
      _
    $region15: #{dqn_agent_forward.1} parent=1 // pred_check_branch
      %27 = sbr.rel (0) target = $region17
    $region16: #{dqn_agent_forward.1} parent=1 // pred_region
      %28 = dma.done [#allocation3], 256
    $region17: #{dqn_agent_forward.1} parent=1 // pred_fallthru
      _
    %v30 = vld [vmem:[%s0] sm:$0xf]
    %v31 = vld [vmem:[#allocation2] sm:$0xf]
    %v32 = vld [vmem:[#allocation2 + $0x4] sm:$0xf]
    %v33 = vld [vmem:[#allocation2 + $0x8] sm:$0xf]
    %v34 = vld [vmem:[#allocation2 + $0xc] sm:$0xf]
    %v35 = vld [vmem:[%s2] sm:$0x1]
    %v37 = vlaneseq
    %v38 = vshrl.u32 %v37, 7
    %v39 = vsub.s32 0, %v38
    %v40 = vrot.slane %v35, %v39
    %v46 = vunpack.c.l.b16 %v31
    %v47 = vunpack.c.l.b16 %v32
    %v48 = vunpack.c.l.b16 %v33
    %v49 = vunpack.c.l.b16 %v34
    %v50 = vpack.c.b16 %v47, %v46
    %v51 = vpack.c.b16 %v49, %v48
    %vm54 = vcmask 261120
    %v56 = vsel %vm54, %v30, 0
    %58 = vmatprep.subr.bf16.mxu0 0
    %59 = vmatpush1.bf16.msra.mxu0 %v50
    %60 = vmatprep.subr.bf16.mxu0 0
    %61 = vmatpush1.bf16.msra.mxu0 %v51
    %62 = vmatprep.subr.bf16.mxu0 0
    %63 = vmatpush1.bf16.msra.mxu0 0
    %64 = vmatprep.subr.bf16.mxu0 0
    %65 = vmatpush1.bf16.msra.mxu0 0
    %66 = vmatprep.subr.bf16.mxu0 0
    %67 = vmatpush1.bf16.msra.mxu0 0
    %68 = vmatprep.subr.bf16.mxu0 0
    %69 = vmatpush1.bf16.msra.mxu0 0
    %70 = vmatprep.subr.bf16.mxu0 0
    %71 = vmatpush1.bf16.msra.mxu0 0
    %72 = vmatprep.subr.bf16.mxu0 0
    %73 = vmatpush1.bf16.msra.mxu0 0
    %74 = vmatprep.subr.bf16.mxu0 0
    %75 = vmatpush1.bf16.msra.mxu0 0
    %76 = vmatprep.subr.bf16.mxu0 0
    %77 = vmatpush1.bf16.msra.mxu0 0
    %78 = vmatprep.subr.bf16.mxu0 0
    %79 = vmatpush1.bf16.msra.mxu0 0
    %80 = vmatprep.subr.bf16.mxu0 0
    %81 = vmatpush1.bf16.msra.mxu0 0
    %82 = vmatprep.subr.bf16.mxu0 0
    %83 = vmatpush1.bf16.msra.mxu0 0
    %84 = vmatprep.subr.bf16.mxu0 0
    %85 = vmatpush1.bf16.msra.mxu0 0
    %86 = vmatprep.subr.bf16.mxu0 0
    %87 = vmatpush1.bf16.msra.mxu0 0
    %88 = vmatprep.subr.bf16.mxu0 0
    %89 = vmatpush1.bf16.msra.mxu0 0
    %90 = vmatprep.mubr.bf16.mxu0 0
    %91 = vmatmul.mubr.bf16.gmra.mrb[0].mxu0 %v56
    %v92 = vpop.f32.mrb[0].mxu0
    %v93 = vadd.f32 %v40, %v92
    %v94 = vpop.f32.mrb[0].mxu0
    %v95 = vpop.f32.mrb[0].mxu0
    %v96 = vpop.f32.mrb[0].mxu0
    %97 = vdwg.mxu0
    %98 = vst [vmem:[#allocation5] sm:$0xff] %v93
    // Predicated region
    $region18: #{dqn_agent_forward.1} parent=1 // pred_check
      _
    $region19: #{dqn_agent_forward.1} parent=1 // pred_check_branch
      %100 = sbr.rel (0) target = $region21
    $region20: #{dqn_agent_forward.1} parent=1 // pred_region
      %s102 = ssub.s32 128, 128
      %103 = vsyncadd [#allocation4], %s102
      %s105 = sshll.u32 [#allocation5], 4
      %s106 = int_to_ptr.vmem [resolvable:$true] %s105
      %108 = dma.vmem_to_hbm [thread:$0]  %s106, 128, %s3, [#allocation4]
    $region21: #{dqn_agent_forward.1} parent=1 // pred_fallthru
      _
    // Predicated region
    $region22: #{dqn_agent_forward.1} parent=1 // pred_check
      _
    $region23: #{dqn_agent_forward.1} parent=1 // pred_check_branch
      %110 = sbr.rel (0) target = $region25
    $region24: #{dqn_agent_forward.1} parent=1 // pred_region
      %111 = dma.done [#allocation4], 128
    $region25: #{dqn_agent_forward.1} parent=1 // pred_fallthru
      _
    %112 = vsyncpa [#allocation3], 1
    %113 = vsyncpa [#allocation4], 1

</llo_original>
